<compile_context>
chip_gen: v7x
topology: tpu7x:2x2x1
jax: 0.10.0
libtpu: 0.0.40
codegen_flags: <defaults>
</compile_context>

<pallas_src>
import functools

import jax
import jax.numpy as jnp
from jax.experimental import pallas as pl
from jax.experimental.pallas import tpu as pltpu


def _make_divisible(v, divisor=8, min_value=None):
    if min_value is None:
        min_value = divisor
    new_v = max(min_value, int(v + divisor / 2) // divisor * divisor)
    if new_v < 0.9 * v:
        new_v += divisor
    return new_v


def _round_up(x, m):
    return (x + m - 1) // m * m


def _device_kind():
    try:
        return jax.devices()[0].device_kind.lower()
    except Exception:
        return ""


def _vmem_plan():
    """Returns (per-block byte budget for the x/out tile, vmem_limit_bytes)."""
    vmem_cap = None
    try:
        vmem_cap = int(getattr(pltpu.get_tpu_info(), "vmem_capacity_bytes", 0)) or None
    except Exception:
        vmem_cap = None
    if vmem_cap is None:
        vmem_cap = 64 * 1024 * 1024          # conservative: v7x per-TC VMEM
    # Leave ~25% headroom for Mosaic internal scratch / weights / spills;
    # never ask for more than 96 MiB even on 128 MiB chips.
    vmem_limit = min((vmem_cap * 3) // 4, 96 * 1024 * 1024)
    if "v7" in _device_kind():
        # v7x: 64 MiB physical per TensorCore — keep the request well under it.
        vmem_limit = min(vmem_limit, 48 * 1024 * 1024)
    # 2x double-buffered input block + 2x output block = 4 block buffers,
    # plus ~2 blocks of intermediate headroom -> budget ~ limit / 8.
    block_budget = vmem_limit // 8
    return block_budget, vmem_limit


def _squeeze_block_kernel(x_ref, w1_ref, b1_ref, w2_ref, b2_ref, o_ref, *, f32_path):
    # x_ref block: (Nb, C, HW) — spatial on the lane axis (lane-dense I/O).
    x = x_ref[...]

    # Global average pool over spatial, accumulated in f32. The 1/HW factor is
    # folded into w1 by the wrapper, so a plain sum is enough here.
    if f32_path:
        xf = x.astype(jnp.float32)
        pooled = jnp.sum(xf, axis=-1)                                 # (Nb, C)
    else:
        pooled = jnp.sum(x, axis=-1, dtype=jnp.float32)               # (Nb, C)

    # 1x1 conv C -> S (+ bias), ReLU. Batched over Nb images (tiny, MXU-trivial,
    # fully hidden under the block DMA — intentionally not tiled further).
    h = jnp.dot(pooled, w1_ref[...],
                preferred_element_type=jnp.float32) + b1_ref[...]     # (Nb, S)
    h = jnp.maximum(h, 0.0)

    # 1x1 conv S -> C (+ bias), h_sigmoid = relu6(x+3)/6.
    s = jnp.dot(h, w2_ref[...],
                preferred_element_type=jnp.float32) + b2_ref[...]     # (Nb, C)
    s = jnp.clip(s + 3.0, 0.0, 6.0) * (1.0 / 6.0)

    # Scale the input: lane-broadcast of the per-(image, channel) scale.
    if f32_path:
        # f32 inputs (or v5e, no bf16 VPU): multiply in f32, cast on store.
        o_ref[...] = (xf * s[:, :, None]).astype(o_ref.dtype)
    else:
        # bf16/fp8 on v6e/v7x: stay in native dtype — no full f32 block copy.
        o_ref[...] = x * s.astype(x.dtype)[:, :, None]


def squeeze_block(x_nchw, w1, b1, w2, b2):
    """x_nchw: (N, C, H, W). w1: (C, S), b1: (S,), w2: (S, C), b2: (C,).

    w1/w2 are the 1x1-conv weights folded into dense matrices, i.e.
    conv.weight[:, :, 0, 0].T for each conv.
    """
    N, C, H, W = x_nchw.shape
    S = w1.shape[1]
    HW = H * W

    # Free, contiguous reshape — no transposes, no extra HBM traffic.
    x_k = x_nchw.reshape(N, C, HW)

    itemsize = jnp.dtype(x_nchw.dtype).itemsize
    # v5e has no bf16 VPU — keep the big multiply in f32 there. 32-bit inputs
    # are already f32, so the "f32 path" is free for them on any chip.
    f32_path = (itemsize == 4) or ("v5" in _device_kind())

    # SE path is tiny; keep its parameters/compute in f32. Fold the 1/HW of the
    # average pool into w1 so the kernel only needs a sum-reduce.
    w1_k = w1.astype(jnp.float32) * (1.0 / HW)
    w2_k = w2.astype(jnp.float32)
    b1_k = b1.reshape(1, S).astype(jnp.float32)
    b2_k = b2.reshape(1, C).astype(jnp.float32)

    # --- block sizing ---------------------------------------------------
    block_budget, vmem_limit = _vmem_plan()

    # Padded VMEM footprint per image: lane dim rounds to 128, sublane dim to
    # 8 (f32) / 16 (bf16) / 32 (int8). Real MobileNetV3 spatial sizes (49, 196,
    # 784, ...) are not 128-multiples, so this can be far larger than raw bytes.
    sublane = {4: 8, 2: 16, 1: 32}.get(itemsize, 8)
    padded_image_bytes = _round_up(C, sublane) * _round_up(HW, 128) * itemsize
    if f32_path and itemsize != 4:
        # f32 copy of the block made inside the kernel on the v5e fallback path.
        padded_image_bytes += _round_up(C, 8) * _round_up(HW, 128) * 4

    Nb = max(1, min(N, block_budget // max(1, padded_image_bytes)))
    if N >= 2:
        # Keep at least 2 grid steps so v7x's two TensorCores both get work
        # (the "parallel" axis only helps if there is more than one step).
        Nb = min(Nb, pl.cdiv(N, 2))
    n_blocks = pl.cdiv(N, Nb)
    # Note: if N % Nb != 0, the padded rows of the last block compute on
    # garbage but are masked on writeback — valid outputs are unaffected.

    kernel = functools.partial(_squeeze_block_kernel, f32_path=f32_path)

    # Advisory cost hint: mem-bound custom call (read x + write out), tiny flops.
    flops = 2 * N * C * HW + 4 * N * C * S
    bytes_accessed = 2 * N * C * HW * itemsize + 4 * (2 * C * S + C + S)

    out_k = pl.pallas_call(
        kernel,
        out_shape=jax.ShapeDtypeStruct((N, C, HW), x_nchw.dtype),
        grid_spec=pltpu.PrefetchScalarGridSpec(
            num_scalar_prefetch=0,
            grid=(n_blocks,),
            in_specs=[
                pl.BlockSpec((Nb, C, HW), lambda n: (n, 0, 0)),
                pl.BlockSpec((C, S), lambda n: (0, 0)),
                pl.BlockSpec((1, S), lambda n: (0, 0)),
                pl.BlockSpec((S, C), lambda n: (0, 0)),
                pl.BlockSpec((1, C), lambda n: (0, 0)),
            ],
            out_specs=pl.BlockSpec((Nb, C, HW), lambda n: (n, 0, 0)),
        ),
        compiler_params=pltpu.CompilerParams(
            dimension_semantics=("parallel",),
            vmem_limit_bytes=int(vmem_limit)),
        cost_estimate=pl.CostEstimate(
            flops=int(flops), transcendentals=0,
            bytes_accessed=int(bytes_accessed)),
    )(x_k, w1_k, b1_k, w2_k, b2_k)

    return out_k.reshape(N, C, H, W)


def squeeze_block_ref(x_nchw, w1, b1, w2, b2):
    """Pure-JAX reference mirroring the PyTorch module."""
    xf = x_nchw.astype(jnp.float32)
    pooled = jnp.mean(xf, axis=(2, 3))                               # (N, C)
    h = jnp.maximum(pooled @ w1 + b1, 0.0)                           # (N, S)
    s = jnp.clip((h @ w2 + b2) + 3.0, 0.0, 6.0) / 6.0                # (N, C)
    return (xf * s[:, :, None, None]).astype(x_nchw.dtype)


if __name__ == "__main__":
    # Small shapes consistent with the module: exp_size = C = 16, divide = 4
    N, C, H, W = 2, 16, 16, 16
    S = _make_divisible(C / 4)   # = 8

    key = jax.random.PRNGKey(0)
    kx, kw1, kb1, kw2, kb2 = jax.random.split(key, 5)

    x = jax.random.normal(kx, (N, C, H, W), dtype=jnp.float32)
    # Synthetic parameters matching Conv2d 1x1 weight shapes (S, C, 1, 1) /
    # (C, S, 1, 1) folded into dense matrices.
    w1 = jax.random.normal(kw1, (C, S), dtype=jnp.float32) * 0.1   # conv1.weight[:, :, 0, 0].T
    b1 = jax.random.normal(kb1, (S,), dtype=jnp.float32) * 0.1
    w2 = jax.random.normal(kw2, (S, C), dtype=jnp.float32) * 0.1   # conv2.weight[:, :, 0, 0].T
    b2 = jax.random.normal(kb2, (C,), dtype=jnp.float32) * 0.1

    out = squeeze_block(x, w1, b1, w2, b2)
    out = jax.block_until_ready(out)

    ref = squeeze_block_ref(x, w1, b1, w2, b2)
    assert out.shape == (N, C, H, W)
    assert out.dtype == x.dtype
    assert jnp.allclose(out, ref, atol=1e-5, rtol=1e-5)

    print("KERNEL_OK")
</pallas_src>

<mosaic_0001>
module attributes {stable_mosaic.version = 11 : i64} {
  func.func @_squeeze_block_kernel(%arg0: i32, %arg1: memref<1x16x256xf32, #tpu.memory_space<vmem>>, %arg2: memref<16x8xf32, #tpu.memory_space<vmem>>, %arg3: memref<1x8xf32, #tpu.memory_space<vmem>>, %arg4: memref<8x16xf32, #tpu.memory_space<vmem>>, %arg5: memref<1x16xf32, #tpu.memory_space<vmem>>, %arg6: memref<1x16x256xf32, #tpu.memory_space<vmem>>) attributes {dimension_semantics = [#tpu.dimension_semantics<parallel>], iteration_bounds = array<i64: 2>, scalar_prefetch = 0 : i64, scratch_operands = 0 : i64, tpu.core_type = #tpu.core_type<tc>, window_params = [{transform_indices = @transform_0, window_bounds = array<i64: 1, 16, 256>}, {pipeline_mode = #tpu.pipeline_mode<synchronous>, transform_indices = @transform_1, window_bounds = array<i64: 16, 8>}, {pipeline_mode = #tpu.pipeline_mode<synchronous>, transform_indices = @transform_2, window_bounds = array<i64: 1, 8>}, {pipeline_mode = #tpu.pipeline_mode<synchronous>, transform_indices = @transform_3, window_bounds = array<i64: 8, 16>}, {pipeline_mode = #tpu.pipeline_mode<synchronous>, transform_indices = @transform_4, window_bounds = array<i64: 1, 16>}, {transform_indices = @transform_5, window_bounds = array<i64: 1, 16, 256>}]} {
    %c0 = arith.constant 0 : index
    %c0_0 = arith.constant 0 : index
    %c0_1 = arith.constant 0 : index
    %0 = vector.load %arg1[%c0, %c0_0, %c0_1] : memref<1x16x256xf32, #tpu.memory_space<vmem>>, vector<1x16x256xf32>
    %cst = arith.constant dense<0.000000e+00> : vector<1x16xf32>
    %1 = vector.multi_reduction <add>, %0, %cst [2] : vector<1x16x256xf32> to vector<1x16xf32>
    %c0_2 = arith.constant 0 : index
    %c0_3 = arith.constant 0 : index
    %2 = vector.load %arg2[%c0_2, %c0_3] : memref<16x8xf32, #tpu.memory_space<vmem>>, vector<16x8xf32>
    %cst_4 = arith.constant dense<0.000000e+00> : vector<1x8xf32>
    %3 = tpu.matmul %1, %2, %cst_4 {dimension_numbers = #tpu.dot_dimension_numbers<[1], [0], [0], [1], [0, 0, 1, 1], [], []>} : vector<1x16xf32>, vector<16x8xf32>, vector<1x8xf32> -> vector<1x8xf32>
    %c0_5 = arith.constant 0 : index
    %c0_6 = arith.constant 0 : index
    %4 = vector.load %arg3[%c0_5, %c0_6] : memref<1x8xf32, #tpu.memory_space<vmem>>, vector<1x8xf32>
    %5 = arith.addf %3, %4 : vector<1x8xf32>
    %cst_7 = arith.constant 0.000000e+00 : f32
    %6 = vector.broadcast %cst_7 : f32 to vector<1x8xf32>
    %7 = arith.maximumf %5, %6 : vector<1x8xf32>
    %c0_8 = arith.constant 0 : index
    %c0_9 = arith.constant 0 : index
    %8 = vector.load %arg4[%c0_8, %c0_9] : memref<8x16xf32, #tpu.memory_space<vmem>>, vector<8x16xf32>
    %cst_10 = arith.constant dense<0.000000e+00> : vector<1x16xf32>
    %9 = tpu.matmul %7, %8, %cst_10 {dimension_numbers = #tpu.dot_dimension_numbers<[1], [0], [0], [1], [0, 0, 1, 1], [], []>} : vector<1x8xf32>, vector<8x16xf32>, vector<1x16xf32> -> vector<1x16xf32>
    %c0_11 = arith.constant 0 : index
    %c0_12 = arith.constant 0 : index
    %10 = vector.load %arg5[%c0_11, %c0_12] : memref<1x16xf32, #tpu.memory_space<vmem>>, vector<1x16xf32>
    %11 = arith.addf %9, %10 : vector<1x16xf32>
    %cst_13 = arith.constant 3.000000e+00 : f32
    %12 = vector.broadcast %cst_13 : f32 to vector<1x16xf32>
    %13 = arith.addf %11, %12 : vector<1x16xf32>
    %cst_14 = arith.constant 0.000000e+00 : f32
    %cst_15 = arith.constant 6.000000e+00 : f32
    %14 = vector.broadcast %cst_14 : f32 to vector<1x16xf32>
    %15 = arith.maximumf %14, %13 : vector<1x16xf32>
    %16 = vector.broadcast %cst_15 : f32 to vector<1x16xf32>
    %17 = arith.minimumf %16, %15 : vector<1x16xf32>
    %cst_16 = arith.constant 0.166666672 : f32
    %18 = vector.broadcast %cst_16 : f32 to vector<1x16xf32>
    %19 = arith.mulf %17, %18 : vector<1x16xf32>
    %20 = vector.shape_cast %19 : vector<1x16xf32> to vector<1x16x1xf32>
    %21 = vector.broadcast %20 : vector<1x16x1xf32> to vector<1x16x256xf32>
    %22 = arith.mulf %0, %21 : vector<1x16x256xf32>
    %c0_17 = arith.constant 0 : index
    %c0_18 = arith.constant 0 : index
    %c0_19 = arith.constant 0 : index
    %23 = vector.load %arg6[%c0_17, %c0_18, %c0_19] : memref<1x16x256xf32, #tpu.memory_space<vmem>>, vector<1x16x256xf32>
    tpu.vector_store %arg6[%c0_17, %c0_18, %c0_19], %22 {strides = array<i32>} : memref<1x16x256xf32, #tpu.memory_space<vmem>>, vector<1x16x256xf32>,
    return
  }
  func.func @transform_0(%arg0: i32) -> (i32, i32, i32) {
    %c0_i32 = arith.constant 0 : i32
    %c0_i32_0 = arith.constant 0 : i32
    %c0_i32_1 = arith.constant 0 : i32
    return %arg0, %c0_i32, %c0_i32_0 : i32, i32, i32
  }
  func.func @transform_1(%arg0: i32) -> (i32, i32) {
    %c0_i32 = arith.constant 0 : i32
    %c0_i32_0 = arith.constant 0 : i32
    %c0_i32_1 = arith.constant 0 : i32
    return %c0_i32, %c0_i32_0 : i32, i32
  }
  func.func @transform_2(%arg0: i32) -> (i32, i32) {
    %c0_i32 = arith.constant 0 : i32
    %c0_i32_0 = arith.constant 0 : i32
    %c0_i32_1 = arith.constant 0 : i32
    return %c0_i32, %c0_i32_0 : i32, i32
  }
  func.func @transform_3(%arg0: i32) -> (i32, i32) {
    %c0_i32 = arith.constant 0 : i32
    %c0_i32_0 = arith.constant 0 : i32
    %c0_i32_1 = arith.constant 0 : i32
    return %c0_i32, %c0_i32_0 : i32, i32
  }
  func.func @transform_4(%arg0: i32) -> (i32, i32) {
    %c0_i32 = arith.constant 0 : i32
    %c0_i32_0 = arith.constant 0 : i32
    %c0_i32_1 = arith.constant 0 : i32
    return %c0_i32, %c0_i32_0 : i32, i32
  }
  func.func @transform_5(%arg0: i32) -> (i32, i32, i32) {
    %c0_i32 = arith.constant 0 : i32
    %c0_i32_0 = arith.constant 0 : i32
    %c0_i32_1 = arith.constant 0 : i32
    return %arg0, %c0_i32, %c0_i32_0 : i32, i32, i32
  }
}

</mosaic_0001>

<llo_original>
// kernel: tpu_custom_call.1
$region0: #{tpu_custom_call.1}
  #allocation0 [shape = 'u32[]', space=smem, size = 0x4, offset = 0x4, fixed_abs, tag = 'smem constant byte address 0x4 - core index']
  #allocation1 [shape = 'u32[144,128]{1,0:T(1,128)}', space=vmem, size = 0x12000, scoped, tag = 'internal scratch']
  %s0 = inlined_call_operand.hbm [shape: f32[2,16,256], index: 0, kind: input, shape index: {}]
  %s1 = inlined_call_operand.vmem [shape: f32[16,8], index: 1, kind: input, shape index: {}]
  %s2 = inlined_call_operand.vmem [shape: f32[1,8], index: 2, kind: input, shape index: {}]
  %s3 = inlined_call_operand.vmem [shape: f32[8,16], index: 3, kind: input, shape index: {}]
  %s4 = inlined_call_operand.vmem [shape: f32[1,16], index: 4, kind: input, shape index: {}]
  %s5 = inlined_call_operand.hbm [shape: f32[2,16,256], index: 5, kind: output, shape index: {}]
  %s6 = sld [smem:[#allocation0]]
  $region57: #{tpu_custom_call.1} parent=0
    _
  %s8 = ssub.s32 1, %s6
  %s9 = scalar_select 0, %s8, %s6
  $region1: #{tpu_custom_call.1} parent=0
    #allocation2 [shape = 'u8[32768]{0}', space=vmem, size = 0x8000, scoped, tag = 'input window, operand 0']
    #allocation3 [shape = 's32[2]{0}', space=sflag, size = 0x8, scoped, tag = 'scoped memory for tpu_custom_call.1']
    #allocation4 [shape = 's32[2]{0}', space=sflag, size = 0x8, scoped, tag = 'scoped memory for tpu_custom_call.1']
    #allocation5 [shape = 'u8[32768]{0}', space=vmem, size = 0x8000, scoped, tag = 'output window, operand 0']
    %10 = vsyncpa [#allocation3], 0
    %s11 = scalar_lea.sflag [#allocation3], 1
    %12 = vsyncpa %s11, 0
    %13 = vsyncpa [#allocation4], 0
    %s14 = scalar_lea.sflag [#allocation4], 1
    %15 = vsyncpa %s14, 0
    loop: start=0, step=1, limit=4
    $region2: #{tpu_custom_call.1} parent=1 // loop_pre_header
      _
    $region3: #{tpu_custom_call.1} parent=1 // loop_header
      %s17 = sphi 0, %s21
      %p18 = scmp.ge.s32.totalorder %s17, 4
      %s27 = sphi 0, %s29
      %s30 = sphi 0, %s27
      %s31 = sphi 0, %s30
      %s47 = sphi 0, %s31
      %s51 = sphi 0, %s51
      %s53 = sphi 0, %s51
      %s54 = sphi 0, %s53
      %s68 = sphi 0, %s54
      %s72 = sphi 0, %s72
      %s74 = sphi 0, %s72
      %s75 = sphi 0, %s74
      %s89 = sphi 0, %s75
      %s93 = sphi 0, %s93
      %s95 = sphi 0, %s93
      %s96 = sphi 0, %s95
      %s110 = sphi 0, %s96
      %s114 = sphi 0, %s114
      %s116 = sphi 0, %s114
      %s117 = sphi 0, %s116
      %s131 = sphi 0, %s117
      %s137 = sphi 0, %s139
      %s140 = sphi 0, %s137
      %s141 = sphi 0, %s140
      %s157 = sphi 0, %s141
    $region4: #{tpu_custom_call.1} parent=1 // loop_header_branch
      %20 = sbr.rel (%p18) target = $region8
    $region5: #{tpu_custom_call.1} parent=1 // loop_body
      %s22 = ssub.s32 %s17, 1
      %s23 = ssub.s32 %s17, 2
      %s24 = sadd.s32 %s17, 1
      %s25 = ssub.s32 %s17, %s24
      %p26 = scmp.eq.s32.totalorder %s25, 0
      %s28 = sadd.s32 %s27, 1
      %s29 = scalar_select %p26, %s27, %s28
      %p32 = pneg %p26
      %p33 = scmp.eq.s32.totalorder %s17, 1
      %p34 = por %p32, %p33
      %p35 = scmp.ne.s32.totalorder %s27, %s30
      %p36 = scmp.eq.s32.totalorder %s17, 0
      %p37 = por %p35, %p36
      %p38 = scmp.ne.s32.totalorder %s27, %s30
      %p39 = scmp.eq.s32.totalorder %s22, 1
      %p40 = por %p38, %p39
      %p41 = scmp.ne.s32.totalorder %s30, %s31
      %p42 = scmp.eq.s32.totalorder %s22, 0
      %p43 = por %p41, %p42
      %p44 = scmp.ne.s32.totalorder %s30, %s31
      %p45 = scmp.eq.s32.totalorder %s23, 1
      %p46 = por %p44, %p45
      %p48 = scmp.ne.s32.totalorder %s31, %s47
      %p49 = scmp.eq.s32.totalorder %s23, 0
      %p50 = por %p48, %p49
      %s52 = sadd.s32 %s51, 1
      %p55 = scmp.eq.s32.totalorder %s17, 1
      %p56 = scmp.ne.s32.totalorder %s51, %s53
      %p57 = scmp.eq.s32.totalorder %s17, 0
      %p58 = por %p56, %p57
      %p59 = scmp.ne.s32.totalorder %s51, %s53
      %p60 = scmp.eq.s32.totalorder %s22, 1
      %p61 = por %p59, %p60
      %p62 = scmp.ne.s32.totalorder %s53, %s54
      %p63 = scmp.eq.s32.totalorder %s22, 0
      %p64 = por %p62, %p63
      %p65 = scmp.ne.s32.totalorder %s53, %s54
      %p66 = scmp.eq.s32.totalorder %s23, 1
      %p67 = por %p65, %p66
      %p69 = scmp.ne.s32.totalorder %s54, %s68
      %p70 = scmp.eq.s32.totalorder %s23, 0
      %p71 = por %p69, %p70
      %s73 = sadd.s32 %s72, 1
      %p76 = scmp.eq.s32.totalorder %s17, 1
      %p77 = scmp.ne.s32.totalorder %s72, %s74
      %p78 = scmp.eq.s32.totalorder %s17, 0
      %p79 = por %p77, %p78
      %p80 = scmp.ne.s32.totalorder %s72, %s74
      %p81 = scmp.eq.s32.totalorder %s22, 1
      %p82 = por %p80, %p81
      %p83 = scmp.ne.s32.totalorder %s74, %s75
      %p84 = scmp.eq.s32.totalorder %s22, 0
      %p85 = por %p83, %p84
      %p86 = scmp.ne.s32.totalorder %s74, %s75
      %p87 = scmp.eq.s32.totalorder %s23, 1
      %p88 = por %p86, %p87
      %p90 = scmp.ne.s32.totalorder %s75, %s89
      %p91 = scmp.eq.s32.totalorder %s23, 0
      %p92 = por %p90, %p91
      %s94 = sadd.s32 %s93, 1
      %p97 = scmp.eq.s32.totalorder %s17, 1
      %p98 = scmp.ne.s32.totalorder %s93, %s95
      %p99 = scmp.eq.s32.totalorder %s17, 0
      %p100 = por %p98, %p99
      %p101 = scmp.ne.s32.totalorder %s93, %s95
      %p102 = scmp.eq.s32.totalorder %s22, 1
      %p103 = por %p101, %p102
      %p104 = scmp.ne.s32.totalorder %s95, %s96
      %p105 = scmp.eq.s32.totalorder %s22, 0
      %p106 = por %p104, %p105
      %p107 = scmp.ne.s32.totalorder %s95, %s96
      %p108 = scmp.eq.s32.totalorder %s23, 1
      %p109 = por %p107, %p108
      %p111 = scmp.ne.s32.totalorder %s96, %s110
      %p112 = scmp.eq.s32.totalorder %s23, 0
      %p113 = por %p111, %p112
      %s115 = sadd.s32 %s114, 1
      %p118 = scmp.eq.s32.totalorder %s17, 1
      %p119 = scmp.ne.s32.totalorder %s114, %s116
      %p120 = scmp.eq.s32.totalorder %s17, 0
      %p121 = por %p119, %p120
      %p122 = scmp.ne.s32.totalorder %s114, %s116
      %p123 = scmp.eq.s32.totalorder %s22, 1
      %p124 = por %p122, %p123
      %p125 = scmp.ne.s32.totalorder %s116, %s117
      %p126 = scmp.eq.s32.totalorder %s22, 0
      %p127 = por %p125, %p126
      %p128 = scmp.ne.s32.totalorder %s116, %s117
      %p129 = scmp.eq.s32.totalorder %s23, 1
      %p130 = por %p128, %p129
      %p132 = scmp.ne.s32.totalorder %s117, %s131
      %p133 = scmp.eq.s32.totalorder %s23, 0
      %p134 = por %p132, %p133
      %s135 = ssub.s32 %s17, %s24
      %p136 = scmp.eq.s32.totalorder %s135, 0
      %s138 = sadd.s32 %s137, 1
      %s139 = scalar_select %p136, %s137, %s138
      %p142 = pneg %p136
      %p143 = scmp.eq.s32.totalorder %s17, 1
      %p144 = por %p142, %p143
      %p145 = scmp.ne.s32.totalorder %s137, %s140
      %p146 = scmp.eq.s32.totalorder %s17, 0
      %p147 = por %p145, %p146
      %p148 = scmp.ne.s32.totalorder %s137, %s140
      %p149 = scmp.eq.s32.totalorder %s22, 1
      %p150 = por %p148, %p149
      %p151 = scmp.ne.s32.totalorder %s140, %s141
      %p152 = scmp.eq.s32.totalorder %s22, 0
      %p153 = por %p151, %p152
      %p154 = scmp.ne.s32.totalorder %s140, %s141
      %p155 = scmp.eq.s32.totalorder %s23, 1
      %p156 = por %p154, %p155
      %p158 = scmp.ne.s32.totalorder %s141, %s157
      %p159 = scmp.eq.s32.totalorder %s23, 0
      %p160 = por %p158, %p159
      %p161 = scmp.le.s32.totalorder 1, %s17
      %p162 = scmp.lt.s32.totalorder %s17, 3
      %p163 = pnand %p161, %p162
      %p164 = pneg %p163
      // Predicated region
      $region9: #{tpu_custom_call.1} parent=5 // pred_check
        _
      $region10: #{tpu_custom_call.1} parent=5 // pred_check_branch
        %166 = sbr.rel (%p163) target = $region12
      $region11: #{tpu_custom_call.1} parent=5 // pred_region
        %s167 = ssub.s32 %s17, 1
        // Predicated region
        $region13: #{tpu_custom_call.1} parent=11 // pred_check
          %p168 = pneg %p64
        $region14: #{tpu_custom_call.1} parent=11 // pred_check_branch
          %170 = sbr.rel (%p168) target = $region16
        $region15: #{tpu_custom_call.1} parent=11 // pred_region
          _
        $region16: #{tpu_custom_call.1} parent=11 // pred_fallthru
          _
        // Predicated region
        $region17: #{tpu_custom_call.1} parent=11 // pred_check
          %p171 = pneg %p85
        $region18: #{tpu_custom_call.1} parent=11 // pred_check_branch
          %173 = sbr.rel (%p171) target = $region20
        $region19: #{tpu_custom_call.1} parent=11 // pred_region
          _
        $region20: #{tpu_custom_call.1} parent=11 // pred_fallthru
          _
        // Predicated region
        $region21: #{tpu_custom_call.1} parent=11 // pred_check
          %p174 = pneg %p106
        $region22: #{tpu_custom_call.1} parent=11 // pred_check_branch
          %176 = sbr.rel (%p174) target = $region24
        $region23: #{tpu_custom_call.1} parent=11 // pred_region
          _
        $region24: #{tpu_custom_call.1} parent=11 // pred_fallthru
          _
        // Predicated region
        $region25: #{tpu_custom_call.1} parent=11 // pred_check
          %p177 = pneg %p127
        $region26: #{tpu_custom_call.1} parent=11 // pred_check_branch
          %179 = sbr.rel (%p177) target = $region28
        $region27: #{tpu_custom_call.1} parent=11 // pred_region
          _
        $region28: #{tpu_custom_call.1} parent=11 // pred_fallthru
          _
      $region12: #{tpu_custom_call.1} parent=5 // pred_fallthru
        _
      %p180 = scmp.lt.s32.totalorder %s17, 2
      // Predicated region
      $region29: #{tpu_custom_call.1} parent=5 // pred_check
        %p181 = pneg %p180
      $region30: #{tpu_custom_call.1} parent=5 // pred_check_branch
        %183 = sbr.rel (%p181) target = $region32
      $region31: #{tpu_custom_call.1} parent=5 // pred_region
        // Predicated region
        $region33: #{tpu_custom_call.1} parent=31 // pred_check
          %p184 = pneg %p37
        $region34: #{tpu_custom_call.1} parent=31 // pred_check_branch
          %186 = sbr.rel (%p184) target = $region36
        $region35: #{tpu_custom_call.1} parent=31 // pred_region
          %s187 = sand.u32 %s27, 1
          %s188 = scalar_lea.sflag [#allocation3], %s187
          %s189 = sand.u32 %s27, 1
          %s190 = smul.addr %s189, 32
          %s191 = scalar_lea.vmem [#allocation2], %s190
          %s193 = ssub.s32 512, 512
          %194 = vsyncadd %s188, %s193
          %s195 = smul.addr %s17, 4
          %s196 = smul.addr %s195, 128
          %s197 = scalar_lea.hbm %s0, %s196
          %s198 = sshll.u32 %s191, 4
          %s199 = int_to_ptr.vmem [resolvable:$true] %s198
          %204 = dma.hbm_to_vmem [thread:$0]  %s197, 512, %s199, %s188, 256, 256, 16
        $region36: #{tpu_custom_call.1} parent=31 // pred_fallthru
          _
      $region32: #{tpu_custom_call.1} parent=5 // pred_fallthru
        _
      %p205 = scmp.le.s32.totalorder 1, %s17
      %p206 = scmp.lt.s32.totalorder %s17, 3
      %p207 = pnand %p205, %p206
      %p208 = pneg %p207
      // Predicated region
      $region37: #{tpu_custom_call.1} parent=5 // pred_check
        _
      $region38: #{tpu_custom_call.1} parent=5 // pred_check_branch
        %210 = sbr.rel (%p207) target = $region40
      $region39: #{tpu_custom_call.1} parent=5 // pred_region
        %s211 = ssub.s32 %s17, 1
        %s212 = sand.u32 %s30, 1
        %s213 = scalar_lea.sflag [#allocation3], %s212
        %s214 = sand.u32 %s30, 1
        %s215 = smul.addr %s214, 32
        %s216 = scalar_lea.vmem [#allocation2], %s215
        // Predicated region
        $region41: #{tpu_custom_call.1} parent=39 // pred_check
          %p217 = pneg %p43
        $region42: #{tpu_custom_call.1} parent=39 // pred_check_branch
          %219 = sbr.rel (%p217) target = $region44
        $region43: #{tpu_custom_call.1} parent=39 // pred_region
          %220 = dma.done %s213, 512
        $region44: #{tpu_custom_call.1} parent=39 // pred_fallthru
          _
        %s221 = sand.u32 %s30, 1
        %s222 = scalar_lea.sflag [#allocation3], %s221
        %s223 = sand.u32 %s30, 1
        %s224 = smul.addr %s223, 32
        %s225 = scalar_lea.vmem [#allocation2], %s224
        %p226 = pneg %p43
        %p227 = pneg %p40
        %p228 = pneg %p64
        %p229 = pneg %p61
        %p230 = pneg %p85
        %p231 = pneg %p82
        %p232 = pneg %p106
        %p233 = pneg %p103
        %p234 = pneg %p127
        %p235 = pneg %p124
        %p236 = pneg %p153
        %p237 = pneg %p150
        %s238 = sand.u32 %s140, 1
        %s239 = scalar_lea.sflag [#allocation4], %s238
        %s240 = sand.u32 %s140, 1
        %s241 = smul.addr %s240, 32
        %s242 = scalar_lea.vmem [#allocation5], %s241
        %v243 = vld [vmem:[%s216] sm:$0xff]
        %v244 = vld [vmem:[%s216 + $0x8] sm:$0xff]
        %v245 = vld [vmem:[%s216 + $0x10] sm:$0xff]
        %v246 = vld [vmem:[%s216 + $0x18] sm:$0xff]
        %v247 = vadd.f32 %v243, %v244
        %248 = vadd.xlane.f32.xlu0 %v247
        %v249 = vpop.xlane.xlu0 %248
        %v250 = vadd.f32 %v245, %v246
        %251 = vadd.xlane.f32.xlu0 %v250
        %v252 = vpop.xlane.xlu0 %251
        %v253 = vld [vmem:[%s1] sm:$0xff]
        %v254 = vld [vmem:[%s1 + $0x8] sm:$0xff]
        %v255 = vld [vmem:[%s2] sm:$0x1]
        %v258 = vlaneseq
        %v259 = vand.u32 %v258, 127
        %v260 = vlaneseq
        %v261 = vshrl.u32 %v260, 7
        %v262 = vsub.s32 %v259, %v261
        %v263 = vrot.slane %v249, %v262
        %v264 = vadd.s32 %v259, 4294967288
        %v265 = vlaneseq
        %v266 = vshrl.u32 %v265, 7
        %v267 = vsub.s32 %v264, %v266
        %v268 = vrot.slane %v252, %v267
        %vm269 = vcmask 130112
        %v270 = vsel %vm269, %v268, %v263
        %vm271 = vcmask 130048
        %v272 = vsel %vm271, %v270, 0
        %274 = vmatprep.subr.mxu0 0.0
        %275 = vmatpush1.msra.mxu0 %v253
        %276 = vmatprep.subr.mxu0 0.0
        %277 = vmatpush1.msra.mxu0 %v254
        %278 = vmatprep.subr.mxu0 0.0
        %279 = vmatpush1.msra.mxu0 0.0
        %280 = vmatprep.subr.mxu0 0.0
        %281 = vmatpush1.msra.mxu0 0.0
        %282 = vmatprep.subr.mxu0 0.0
        %283 = vmatpush1.msra.mxu0 0.0
        %284 = vmatprep.subr.mxu0 0.0
        %285 = vmatpush1.msra.mxu0 0.0
        %286 = vmatprep.subr.mxu0 0.0
        %287 = vmatpush1.msra.mxu0 0.0
        %288 = vmatprep.subr.mxu0 0.0
        %289 = vmatpush1.msra.mxu0 0.0
        %290 = vmatprep.subr.mxu0 0.0
        %291 = vmatpush1.msra.mxu0 0.0
        %292 = vmatprep.subr.mxu0 0.0
        %293 = vmatpush1.msra.mxu0 0.0
        %294 = vmatprep.subr.mxu0 0.0
        %295 = vmatpush1.msra.mxu0 0.0
        %296 = vmatprep.subr.mxu0 0.0
        %297 = vmatpush1.msra.mxu0 0.0
        %298 = vmatprep.subr.mxu0 0.0
        %299 = vmatpush1.msra.mxu0 0.0
        %300 = vmatprep.subr.mxu0 0.0
        %301 = vmatpush1.msra.mxu0 0.0
        %302 = vmatprep.subr.mxu0 0.0
        %303 = vmatpush1.msra.mxu0 0.0
        %304 = vmatprep.subr.mxu0 0.0
        %305 = vmatpush1.msra.mxu0 0.0
        %306 = vmatprep.subr.mxu0 0.0
        %307 = vmatpush1.msra.mxu0 0.0
        %308 = vmatprep.subr.mxu0 0.0
        %309 = vmatpush1.msra.mxu0 0.0
        %310 = vmatprep.subr.mxu0 0.0
        %311 = vmatpush1.msra.mxu0 0.0
        %312 = vmatprep.subr.mxu0 0.0
        %313 = vmatpush1.msra.mxu0 0.0
        %314 = vmatprep.subr.mxu0 0.0
        %315 = vmatpush1.msra.mxu0 0.0
        %316 = vmatprep.subr.mxu0 0.0
        %317 = vmatpush1.msra.mxu0 0.0
        %318 = vmatprep.subr.mxu0 0.0
        %319 = vmatpush1.msra.mxu0 0.0
        %320 = vmatprep.subr.mxu0 0.0
        %321 = vmatpush1.msra.mxu0 0.0
        %322 = vmatprep.subr.mxu0 0.0
        %323 = vmatpush1.msra.mxu0 0.0
        %324 = vmatprep.subr.mxu0 0.0
        %325 = vmatpush1.msra.mxu0 0.0
        %326 = vmatprep.subr.mxu0 0.0
        %327 = vmatpush1.msra.mxu0 0.0
        %328 = vmatprep.subr.mxu0 0.0
        %329 = vmatpush1.msra.mxu0 0.0
        %330 = vmatprep.subr.mxu0 0.0
        %331 = vmatpush1.msra.mxu0 0.0
        %332 = vmatprep.subr.mxu0 0.0
        %333 = vmatpush1.msra.mxu0 0.0
        %334 = vmatprep.subr.mxu0 0.0
        %335 = vmatpush1.msra.mxu0 0.0
        %336 = vmatprep.subr.mxu0 0.0
        %337 = vmatpush1.msra.mxu0 0.0
        %338 = vmatprep.mubr.f32.mxu0 0.0
        %339 = vmatmul.mubr.f32.gmra.mrb[0].mxu0 %v272
        %v340 = vpop.f32.mrb[0].mxu0
        %v341 = vadd.f32 %v255, %v340
        %v342 = vpop.f32.mrb[0].mxu0
        %343 = vdwg.mxu0
        %v344 = vmax.f32 %v341, 0.0
        %v345 = vld [vmem:[%s3] sm:$0xff]
        %v346 = vld [vmem:[%s4] sm:$0x1]
        %vm347 = vcmask 64512
        %v349 = vsel %vm347, %v344, 0
        %351 = vmatprep.subr.mxu0 0.0
        %352 = vmatpush1.msra.mxu0 %v345
        %353 = vmatprep.subr.mxu0 0.0
        %354 = vmatpush1.msra.mxu0 0.0
        %355 = vmatprep.subr.mxu0 0.0
        %356 = vmatpush1.msra.mxu0 0.0
        %357 = vmatprep.subr.mxu0 0.0
        %358 = vmatpush1.msra.mxu0 0.0
        %359 = vmatprep.subr.mxu0 0.0
        %360 = vmatpush1.msra.mxu0 0.0
        %361 = vmatprep.subr.mxu0 0.0
        %362 = vmatpush1.msra.mxu0 0.0
        %363 = vmatprep.subr.mxu0 0.0
        %364 = vmatpush1.msra.mxu0 0.0
        %365 = vmatprep.subr.mxu0 0.0
        %366 = vmatpush1.msra.mxu0 0.0
        %367 = vmatprep.subr.mxu0 0.0
        %368 = vmatpush1.msra.mxu0 0.0
        %369 = vmatprep.subr.mxu0 0.0
        %370 = vmatpush1.msra.mxu0 0.0
        %371 = vmatprep.subr.mxu0 0.0
        %372 = vmatpush1.msra.mxu0 0.0
        %373 = vmatprep.subr.mxu0 0.0
        %374 = vmatpush1.msra.mxu0 0.0
        %375 = vmatprep.subr.mxu0 0.0
        %376 = vmatpush1.msra.mxu0 0.0
        %377 = vmatprep.subr.mxu0 0.0
        %378 = vmatpush1.msra.mxu0 0.0
        %379 = vmatprep.subr.mxu0 0.0
        %380 = vmatpush1.msra.mxu0 0.0
        %381 = vmatprep.subr.mxu0 0.0
        %382 = vmatpush1.msra.mxu0 0.0
        %383 = vmatprep.subr.mxu0 0.0
        %384 = vmatpush1.msra.mxu0 0.0
        %385 = vmatprep.subr.mxu0 0.0
        %386 = vmatpush1.msra.mxu0 0.0
        %387 = vmatprep.subr.mxu0 0.0
        %388 = vmatpush1.msra.mxu0 0.0
        %389 = vmatprep.subr.mxu0 0.0
        %390 = vmatpush1.msra.mxu0 0.0
        %391 = vmatprep.subr.mxu0 0.0
        %392 = vmatpush1.msra.mxu0 0.0
        %393 = vmatprep.subr.mxu0 0.0
        %394 = vmatpush1.msra.mxu0 0.0
        %395 = vmatprep.subr.mxu0 0.0
        %396 = vmatpush1.msra.mxu0 0.0
        %397 = vmatprep.subr.mxu0 0.0
        %398 = vmatpush1.msra.mxu0 0.0
        %399 = vmatprep.subr.mxu0 0.0
        %400 = vmatpush1.msra.mxu0 0.0
        %401 = vmatprep.subr.mxu0 0.0
        %402 = vmatpush1.msra.mxu0 0.0
        %403 = vmatprep.subr.mxu0 0.0
        %404 = vmatpush1.msra.mxu0 0.0
        %405 = vmatprep.subr.mxu0 0.0
        %406 = vmatpush1.msra.mxu0 0.0
        %407 = vmatprep.subr.mxu0 0.0
        %408 = vmatpush1.msra.mxu0 0.0
        %409 = vmatprep.subr.mxu0 0.0
        %410 = vmatpush1.msra.mxu0 0.0
        %411 = vmatprep.subr.mxu0 0.0
        %412 = vmatpush1.msra.mxu0 0.0
        %413 = vmatprep.subr.mxu0 0.0
        %414 = vmatpush1.msra.mxu0 0.0
        %415 = vmatprep.mubr.f32.mxu0 0.0
        %416 = vmatmul.mubr.f32.gmra.mrb[0].mxu0 %v349
        %v417 = vpop.f32.mrb[0].mxu0
        %v418 = vadd.f32 %v346, %v417
        %v419 = vpop.f32.mrb[0].mxu0
        %420 = vdwg.mxu0
        %v421 = vadd.f32 %v418, 3.0
        %v422 = vmax.f32 %v421, 0.0
        %v423 = vmin.f32 %v422, 6.0
        %v424 = vmul.f32 %v423, 0.16666667
        %v425 = vlaneseq
        %v426 = vshrl.u32 %v425, 7
        %v427 = vsub.s32 0, %v426
        %v428 = vrot.slane %v424, %v427
        %430 = vbcast.lane.b32.xlu0 %v428, 256
        %v431 = vpop.permute.xlu0 %430
        %s433 = sor.u32 256, 8
        %434 = vbcast.lane.b32.xlu0 %v428, %s433
        %v435 = vpop.permute.xlu0 %434
        %v436 = vmul.f32 %v243, %v431
        %v437 = vmul.f32 %v244, %v431
        %v438 = vmul.f32 %v245, %v435
        %v439 = vmul.f32 %v246, %v435
        %440 = vst [vmem:[%s242] sm:$0xff] %v436
        %441 = vst [vmem:[%s242 + $0x8] sm:$0xff] %v437
        %442 = vst [vmem:[%s242 + $0x10] sm:$0xff] %v438
        %443 = vst [vmem:[%s242 + $0x18] sm:$0xff] %v439
        %s444 = sand.u32 %s140, 1
        %s445 = scalar_lea.sflag [#allocation4], %s444
        %s446 = sand.u32 %s140, 1
        %s447 = smul.addr %s446, 32
        %s448 = scalar_lea.vmem [#allocation5], %s447
        // Predicated region
        $region45: #{tpu_custom_call.1} parent=39 // pred_check
          %p449 = pneg %p150
        $region46: #{tpu_custom_call.1} parent=39 // pred_check_branch
          %451 = sbr.rel (%p449) target = $region48
        $region47: #{tpu_custom_call.1} parent=39 // pred_region
          %s453 = ssub.s32 512, 512
          %454 = vsyncadd %s445, %s453
          %s455 = smul.addr %s22, 4
          %s456 = smul.addr %s455, 128
          %s457 = scalar_lea.hbm %s5, %s456
          %s458 = sshll.u32 %s448, 4
          %s459 = int_to_ptr.vmem [resolvable:$true] %s458
          %464 = dma.vmem_to_hbm [thread:$0]  %s459, 512, %s457, %s445, 256, 256, 16
        $region48: #{tpu_custom_call.1} parent=39 // pred_fallthru
          _
      $region40: #{tpu_custom_call.1} parent=5 // pred_fallthru
        _
      %p465 = scmp.le.s32.totalorder 2, %s17
      // Predicated region
      $region49: #{tpu_custom_call.1} parent=5 // pred_check
        %p466 = pneg %p465
      $region50: #{tpu_custom_call.1} parent=5 // pred_check_branch
        %468 = sbr.rel (%p466) target = $region52
      $region51: #{tpu_custom_call.1} parent=5 // pred_region
        %s469 = ssub.s32 %s17, 2
        // Predicated region
        $region53: #{tpu_custom_call.1} parent=51 // pred_check
          %p470 = pneg %p156
        $region54: #{tpu_custom_call.1} parent=51 // pred_check_branch
          %472 = sbr.rel (%p470) target = $region56
        $region55: #{tpu_custom_call.1} parent=51 // pred_region
          %s473 = sand.u32 %s141, 1
          %s474 = scalar_lea.sflag [#allocation4], %s473
          %s475 = sand.u32 %s141, 1
          %s476 = smul.addr %s475, 32
          %s477 = scalar_lea.vmem [#allocation5], %s476
          %478 = dma.done %s474, 512
        $region56: #{tpu_custom_call.1} parent=51 // pred_fallthru
          _
      $region52: #{tpu_custom_call.1} parent=5 // pred_fallthru
        _
    $region6: #{tpu_custom_call.1} parent=1 // loop_footer
      %s21 = sadd.s32 1, %s17
    $region7: #{tpu_custom_call.1} parent=1 // loop_footer_branch
      %16 = sbr.rel target = $region3
    $region8: #{tpu_custom_call.1} parent=1 // loop_exit
      _
    %479 = vsyncpa [#allocation3], 1
    %s480 = scalar_lea.sflag [#allocation3], 1
    %481 = vsyncpa %s480, 1
    %482 = vsyncpa [#allocation4], 1
    %s483 = scalar_lea.sflag [#allocation4], 1
    %484 = vsyncpa %s483, 1

</llo_original>
